<compile_context>
chip_gen: v7x
topology: tpu7x:2x2x1
jax: 0.10.0
libtpu: 0.0.40
codegen_flags: <defaults>
</compile_context>

<pallas_src>
import jax
import jax.numpy as jnp
from jax.experimental import pallas as pl
from jax.experimental.pallas import tpu as pltpu

EPS_ROT = 1e-6    # kornia angle_axis_to_rotation_matrix eps
EPS_PROJ = 1e-8   # kornia convert_points_from_homogeneous eps
LANE = 128
MAX_TILE_N = 4096


def _camera_transform_kernel(scal_ref, pts_ref, cam_ref, proj_ref):
    """One (batch, N-tile) per grid step.

    scal_ref: (B, 16) f32 in SMEM  -> [R00..R22, tx, ty, tz, fx, fy, cx, cy]
    pts_ref : (1, 3, TILE_N) VMEM  (channel-major, N on the lane axis)
    cam_ref : (1, 3, TILE_N) VMEM
    proj_ref: (1, 2, TILE_N) VMEM
    """
    b = pl.program_id(0)

    # Per-batch scalars (precomputed rotation matrix, translation, intrinsics).
    r00 = scal_ref[b, 0]
    r01 = scal_ref[b, 1]
    r02 = scal_ref[b, 2]
    r10 = scal_ref[b, 3]
    r11 = scal_ref[b, 4]
    r12 = scal_ref[b, 5]
    r20 = scal_ref[b, 6]
    r21 = scal_ref[b, 7]
    r22 = scal_ref[b, 8]
    tx = scal_ref[b, 9]
    ty = scal_ref[b, 10]
    tz = scal_ref[b, 11]
    fx = scal_ref[b, 12]
    fy = scal_ref[b, 13]
    cx = scal_ref[b, 14]
    cy = scal_ref[b, 15]

    # Lane-dense coordinate rows: (1, TILE_N).
    px = pts_ref[0, 0:1, :]
    py = pts_ref[0, 1:2, :]
    pz = pts_ref[0, 2:3, :]

    # cam = R @ p + t  (scalar-broadcast FMAs on the VPU).
    cam_x = r00 * px + r01 * py + r02 * pz + tx
    cam_y = r10 * px + r11 * py + r12 * pz + ty
    cam_z = r20 * px + r21 * py + r22 * pz + tz

    # Full lane-dense row stores (no masked single-lane vst.msk).
    cam_ref[0, 0:1, :] = cam_x
    cam_ref[0, 1:2, :] = cam_y
    cam_ref[0, 2:3, :] = cam_z

    # Perspective divide: route the reciprocal to the EUP, guard z ~ 0 like kornia.
    inv_z = pl.reciprocal(cam_z, approx=False)
    scale = jnp.where(jnp.abs(cam_z) > EPS_PROJ, inv_z, jnp.ones_like(cam_z))

    proj_ref[0, 0:1, :] = fx * (cam_x * scale) + cx
    proj_ref[0, 1:2, :] = fy * (cam_y * scale) + cy


def _round_up(x, m):
    return ((x + m - 1) // m) * m


def camera_transform(points, rvec, tvec, C, *, max_tile_n=MAX_TILE_N):
    """points: (B, N, 3), rvec: (B, 3), tvec: (B, 3), C: (3, 3).

    Returns (cam_points (B, N, 3, 1), projected (B, N, 2)) to match the PyTorch module.
    """
    B, N, _ = points.shape
    points = points.astype(jnp.float32)
    rvec = rvec.astype(jnp.float32)
    tvec = tvec.astype(jnp.float32)
    C = C.astype(jnp.float32)

    # ---- O(B) Rodrigues setup, hoisted out of the per-tile path (plain JAX). ----
    theta2 = jnp.sum(rvec * rvec, axis=-1)                      # (B,)
    theta = jnp.sqrt(theta2)
    w = rvec / (theta + EPS_ROT)[..., None]
    wx, wy, wz = w[..., 0], w[..., 1], w[..., 2]
    c, s = jnp.cos(theta), jnp.sin(theta)
    k = 1.0 - c
    R_n = jnp.stack([
        jnp.stack([c + wx * wx * k, wx * wy * k - wz * s, wy * s + wx * wz * k], -1),
        jnp.stack([wz * s + wx * wy * k, c + wy * wy * k, -wx * s + wy * wz * k], -1),
        jnp.stack([-wy * s + wx * wz * k, wx * s + wy * wz * k, c + wz * wz * k], -1),
    ], axis=-2)                                                 # (B, 3, 3)
    rx, ry, rz = rvec[..., 0], rvec[..., 1], rvec[..., 2]
    one = jnp.ones_like(rx)
    R_t = jnp.stack([
        jnp.stack([one, -rz, ry], -1),
        jnp.stack([rz, one, -rx], -1),
        jnp.stack([-ry, rx, one], -1),
    ], axis=-2)                                                 # (B, 3, 3)
    m = (theta2 > EPS_ROT).astype(jnp.float32)[..., None, None]
    R = m * R_n + (1.0 - m) * R_t                               # (B, 3, 3)

    intr = jnp.broadcast_to(
        jnp.stack([C[0, 0], C[1, 1], C[0, 2], C[1, 2]]), (B, 4))
    scal = jnp.concatenate(
        [R.reshape(B, 9), tvec.reshape(B, 3), intr], axis=-1)   # (B, 16) f32

    # ---- Channel-major layout with N on the lane axis, padded to a lane tile. ----
    tile_n = min(max_tile_n, _round_up(N, LANE))
    n_pad = _round_up(N, tile_n)
    n_tiles = n_pad // tile_n

    pts = jnp.transpose(points, (0, 2, 1))                      # (B, 3, N)
    if n_pad != N:
        pts = jnp.pad(pts, ((0, 0), (0, 0), (0, n_pad - N)))

    cam, proj = pl.pallas_call(
        _camera_transform_kernel,
        out_shape=(jax.ShapeDtypeStruct((B, 3, n_pad), jnp.float32),
                   jax.ShapeDtypeStruct((B, 2, n_pad), jnp.float32)),
        grid_spec=pltpu.PrefetchScalarGridSpec(
            num_scalar_prefetch=0,
            grid=(B, n_tiles),
            in_specs=[
                # Per-batch scalars: whole array resident in SMEM.
                pl.BlockSpec(memory_space=pltpu.MemorySpace.SMEM),
                # Points: lane-dense (1, 3, TILE_N) tiles.
                pl.BlockSpec((1, 3, tile_n), lambda b, n: (b, 0, n)),
            ],
            out_specs=[
                pl.BlockSpec((1, 3, tile_n), lambda b, n: (b, 0, n)),
                pl.BlockSpec((1, 2, tile_n), lambda b, n: (b, 0, n)),
            ],
        ),
        compiler_params=pltpu.CompilerParams(
            dimension_semantics=("parallel", "parallel")),
    )(scal, pts)

    cam = jnp.transpose(cam[:, :, :N], (0, 2, 1)).reshape(B, N, 3, 1)
    proj = jnp.transpose(proj[:, :, :N], (0, 2, 1))
    return cam, proj


def _reference(points, rvec, tvec, C):
    """Pure-JAX reference of the PyTorch forward (for verification)."""
    theta2 = jnp.sum(rvec * rvec, axis=-1)
    theta = jnp.sqrt(theta2)
    w = rvec / (theta + EPS_ROT)[..., None]
    wx, wy, wz = w[..., 0], w[..., 1], w[..., 2]
    c, s = jnp.cos(theta), jnp.sin(theta)
    k = 1.0 - c
    R_n = jnp.stack([
        jnp.stack([c + wx * wx * k, wx * wy * k - wz * s, wy * s + wx * wz * k], -1),
        jnp.stack([wz * s + wx * wy * k, c + wy * wy * k, -wx * s + wy * wz * k], -1),
        jnp.stack([-wy * s + wx * wz * k, wx * s + wy * wz * k, c + wz * wz * k], -1),
    ], axis=-2)
    rx, ry, rz = rvec[..., 0], rvec[..., 1], rvec[..., 2]
    one = jnp.ones_like(rx)
    R_t = jnp.stack([
        jnp.stack([one, -rz, ry], -1),
        jnp.stack([rz, one, -rx], -1),
        jnp.stack([-ry, rx, one], -1),
    ], axis=-2)
    m = (theta2 > EPS_ROT).astype(jnp.float32)[..., None, None]
    R = m * R_n + (1.0 - m) * R_t
    cam = jnp.einsum("bij,bnj->bni", R, points) + tvec[:, None, :]
    z = cam[..., 2:3]
    scale = jnp.where(jnp.abs(z) > EPS_PROJ, 1.0 / z, jnp.ones_like(z))
    xy = cam[..., :2] * scale
    u = C[0, 0] * xy[..., 0] + C[0, 2]
    v = C[1, 1] * xy[..., 1] + C[1, 2]
    return cam[..., None], jnp.stack([u, v], axis=-1)


if __name__ == "__main__":
    B, N = 2, 8  # batch_size=2, num_points=8
    key = jax.random.PRNGKey(0)
    k1, k2, k3 = jax.random.split(key, 3)

    points = jax.random.normal(k1, (B, N, 3), dtype=jnp.float32)
    rvec = 0.5 * jax.random.normal(k2, (B, 3), dtype=jnp.float32)
    tvec = jax.random.normal(k3, (B, 3), dtype=jnp.float32) + jnp.array(
        [0.0, 0.0, 3.0], dtype=jnp.float32)  # push points in front of the camera
    C = jnp.eye(3, dtype=jnp.float32)        # module hard-codes identity intrinsics

    cam_pts, projected = camera_transform(points, rvec, tvec, C)
    jax.block_until_ready((cam_pts, projected))

    cam_ref, proj_ref = _reference(points, rvec, tvec, C)
    assert cam_pts.shape == (B, N, 3, 1) and projected.shape == (B, N, 2)
    assert jnp.allclose(cam_pts, cam_ref, atol=1e-5, rtol=1e-5)
    assert jnp.allclose(projected, proj_ref, atol=1e-5, rtol=1e-5)

    print("KERNEL_OK")
</pallas_src>

<mosaic_0001>
module attributes {stable_mosaic.version = 11 : i64} {
  func.func @_camera_transform_kernel(%arg0: i32, %arg1: i32, %arg2: memref<2x16xf32, #tpu.memory_space<smem>>, %arg3: memref<1x3x128xf32, #tpu.memory_space<vmem>>, %arg4: memref<1x3x128xf32, #tpu.memory_space<vmem>>, %arg5: memref<1x2x128xf32, #tpu.memory_space<vmem>>) attributes {dimension_semantics = [#tpu.dimension_semantics<parallel>, #tpu.dimension_semantics<parallel>], iteration_bounds = array<i64: 2, 1>, scalar_prefetch = 0 : i64, scratch_operands = 0 : i64, tpu.core_type = #tpu.core_type<tc>, window_params = [{transform_indices = @transform_0, window_bounds = array<i64: 2, 16>}, {transform_indices = @transform_1, window_bounds = array<i64: 1, 3, 128>}, {transform_indices = @transform_2, window_bounds = array<i64: 1, 3, 128>}, {transform_indices = @transform_3, window_bounds = array<i64: 1, 2, 128>}]} {
    %0 = arith.index_cast %arg0 : i32 to index
    %c0 = arith.constant 0 : index
    %1 = memref.load %arg2[%0, %c0] : memref<2x16xf32, #tpu.memory_space<smem>>
    %2 = arith.index_cast %arg0 : i32 to index
    %c1 = arith.constant 1 : index
    %3 = memref.load %arg2[%2, %c1] : memref<2x16xf32, #tpu.memory_space<smem>>
    %4 = arith.index_cast %arg0 : i32 to index
    %c2 = arith.constant 2 : index
    %5 = memref.load %arg2[%4, %c2] : memref<2x16xf32, #tpu.memory_space<smem>>
    %6 = arith.index_cast %arg0 : i32 to index
    %c3 = arith.constant 3 : index
    %7 = memref.load %arg2[%6, %c3] : memref<2x16xf32, #tpu.memory_space<smem>>
    %8 = arith.index_cast %arg0 : i32 to index
    %c4 = arith.constant 4 : index
    %9 = memref.load %arg2[%8, %c4] : memref<2x16xf32, #tpu.memory_space<smem>>
    %10 = arith.index_cast %arg0 : i32 to index
    %c5 = arith.constant 5 : index
    %11 = memref.load %arg2[%10, %c5] : memref<2x16xf32, #tpu.memory_space<smem>>
    %12 = arith.index_cast %arg0 : i32 to index
    %c6 = arith.constant 6 : index
    %13 = memref.load %arg2[%12, %c6] : memref<2x16xf32, #tpu.memory_space<smem>>
    %14 = arith.index_cast %arg0 : i32 to index
    %c7 = arith.constant 7 : index
    %15 = memref.load %arg2[%14, %c7] : memref<2x16xf32, #tpu.memory_space<smem>>
    %16 = arith.index_cast %arg0 : i32 to index
    %c8 = arith.constant 8 : index
    %17 = memref.load %arg2[%16, %c8] : memref<2x16xf32, #tpu.memory_space<smem>>
    %18 = arith.index_cast %arg0 : i32 to index
    %c9 = arith.constant 9 : index
    %19 = memref.load %arg2[%18, %c9] : memref<2x16xf32, #tpu.memory_space<smem>>
    %20 = arith.index_cast %arg0 : i32 to index
    %c10 = arith.constant 10 : index
    %21 = memref.load %arg2[%20, %c10] : memref<2x16xf32, #tpu.memory_space<smem>>
    %22 = arith.index_cast %arg0 : i32 to index
    %c11 = arith.constant 11 : index
    %23 = memref.load %arg2[%22, %c11] : memref<2x16xf32, #tpu.memory_space<smem>>
    %24 = arith.index_cast %arg0 : i32 to index
    %c12 = arith.constant 12 : index
    %25 = memref.load %arg2[%24, %c12] : memref<2x16xf32, #tpu.memory_space<smem>>
    %26 = arith.index_cast %arg0 : i32 to index
    %c13 = arith.constant 13 : index
    %27 = memref.load %arg2[%26, %c13] : memref<2x16xf32, #tpu.memory_space<smem>>
    %28 = arith.index_cast %arg0 : i32 to index
    %c14 = arith.constant 14 : index
    %29 = memref.load %arg2[%28, %c14] : memref<2x16xf32, #tpu.memory_space<smem>>
    %30 = arith.index_cast %arg0 : i32 to index
    %c15 = arith.constant 15 : index
    %31 = memref.load %arg2[%30, %c15] : memref<2x16xf32, #tpu.memory_space<smem>>
    %c0_0 = arith.constant 0 : index
    %c0_1 = arith.constant 0 : index
    %c0_2 = arith.constant 0 : index
    %32 = vector.load %arg3[%c0_0, %c0_1, %c0_2] : memref<1x3x128xf32, #tpu.memory_space<vmem>>, vector<1x1x128xf32>
    %33 = vector.shape_cast %32 : vector<1x1x128xf32> to vector<1x128xf32>
    %c0_3 = arith.constant 0 : index
    %c1_4 = arith.constant 1 : index
    %c0_5 = arith.constant 0 : index
    %34 = vector.load %arg3[%c0_3, %c1_4, %c0_5] : memref<1x3x128xf32, #tpu.memory_space<vmem>>, vector<1x1x128xf32>
    %35 = vector.shape_cast %34 : vector<1x1x128xf32> to vector<1x128xf32>
    %c0_6 = arith.constant 0 : index
    %c2_7 = arith.constant 2 : index
    %c0_8 = arith.constant 0 : index
    %36 = vector.load %arg3[%c0_6, %c2_7, %c0_8] : memref<1x3x128xf32, #tpu.memory_space<vmem>>, vector<1x1x128xf32>
    %37 = vector.shape_cast %36 : vector<1x1x128xf32> to vector<1x128xf32>
    %38 = vector.broadcast %1 : f32 to vector<1x128xf32>
    %39 = arith.mulf %38, %33 : vector<1x128xf32>
    %40 = vector.broadcast %3 : f32 to vector<1x128xf32>
    %41 = arith.mulf %40, %35 : vector<1x128xf32>
    %42 = arith.addf %39, %41 : vector<1x128xf32>
    %43 = vector.broadcast %5 : f32 to vector<1x128xf32>
    %44 = arith.mulf %43, %37 : vector<1x128xf32>
    %45 = arith.addf %42, %44 : vector<1x128xf32>
    %46 = vector.broadcast %19 : f32 to vector<1x128xf32>
    %47 = arith.addf %45, %46 : vector<1x128xf32>
    %48 = vector.broadcast %7 : f32 to vector<1x128xf32>
    %49 = arith.mulf %48, %33 : vector<1x128xf32>
    %50 = vector.broadcast %9 : f32 to vector<1x128xf32>
    %51 = arith.mulf %50, %35 : vector<1x128xf32>
    %52 = arith.addf %49, %51 : vector<1x128xf32>
    %53 = vector.broadcast %11 : f32 to vector<1x128xf32>
    %54 = arith.mulf %53, %37 : vector<1x128xf32>
    %55 = arith.addf %52, %54 : vector<1x128xf32>
    %56 = vector.broadcast %21 : f32 to vector<1x128xf32>
    %57 = arith.addf %55, %56 : vector<1x128xf32>
    %58 = vector.broadcast %13 : f32 to vector<1x128xf32>
    %59 = arith.mulf %58, %33 : vector<1x128xf32>
    %60 = vector.broadcast %15 : f32 to vector<1x128xf32>
    %61 = arith.mulf %60, %35 : vector<1x128xf32>
    %62 = arith.addf %59, %61 : vector<1x128xf32>
    %63 = vector.broadcast %17 : f32 to vector<1x128xf32>
    %64 = arith.mulf %63, %37 : vector<1x128xf32>
    %65 = arith.addf %62, %64 : vector<1x128xf32>
    %66 = vector.broadcast %23 : f32 to vector<1x128xf32>
    %67 = arith.addf %65, %66 : vector<1x128xf32>
    %c0_9 = arith.constant 0 : index
    %c0_10 = arith.constant 0 : index
    %c0_11 = arith.constant 0 : index
    %68 = vector.load %arg4[%c0_9, %c0_10, %c0_11] : memref<1x3x128xf32, #tpu.memory_space<vmem>>, vector<1x1x128xf32>
    %69 = vector.shape_cast %68 : vector<1x1x128xf32> to vector<1x128xf32>
    %70 = vector.shape_cast %47 : vector<1x128xf32> to vector<1x1x128xf32>
    tpu.vector_store %arg4[%c0_9, %c0_10, %c0_11], %70 {strides = array<i32>} : memref<1x3x128xf32, #tpu.memory_space<vmem>>, vector<1x1x128xf32>,
    %c0_12 = arith.constant 0 : index
    %c1_13 = arith.constant 1 : index
    %c0_14 = arith.constant 0 : index
    %71 = vector.load %arg4[%c0_12, %c1_13, %c0_14] : memref<1x3x128xf32, #tpu.memory_space<vmem>>, vector<1x1x128xf32>
    %72 = vector.shape_cast %71 : vector<1x1x128xf32> to vector<1x128xf32>
    %73 = vector.shape_cast %57 : vector<1x128xf32> to vector<1x1x128xf32>
    tpu.vector_store %arg4[%c0_12, %c1_13, %c0_14], %73 {strides = array<i32>} : memref<1x3x128xf32, #tpu.memory_space<vmem>>, vector<1x1x128xf32>,
    %c0_15 = arith.constant 0 : index
    %c2_16 = arith.constant 2 : index
    %c0_17 = arith.constant 0 : index
    %74 = vector.load %arg4[%c0_15, %c2_16, %c0_17] : memref<1x3x128xf32, #tpu.memory_space<vmem>>, vector<1x1x128xf32>
    %75 = vector.shape_cast %74 : vector<1x1x128xf32> to vector<1x128xf32>
    %76 = vector.shape_cast %67 : vector<1x128xf32> to vector<1x1x128xf32>
    tpu.vector_store %arg4[%c0_15, %c2_16, %c0_17], %76 {strides = array<i32>} : memref<1x3x128xf32, #tpu.memory_space<vmem>>, vector<1x1x128xf32>,
    %77 = tpu.reciprocal %67 : vector<1x128xf32> -> vector<1x128xf32>
    %78 = math.absf %67 : vector<1x128xf32>
    %cst = arith.constant 9.99999993E-9 : f32
    %79 = vector.broadcast %cst : f32 to vector<1x128xf32>
    %80 = arith.cmpf ogt, %78, %79 : vector<1x128xf32>
    %cst_18 = arith.constant 1.000000e+00 : f32
    %81 = vector.broadcast %cst_18 : f32 to vector<1x128xf32>
    %82 = arith.select %80, %77, %81 : vector<1x128xi1>, vector<1x128xf32>
    %83 = arith.mulf %47, %82 : vector<1x128xf32>
    %84 = vector.broadcast %25 : f32 to vector<1x128xf32>
    %85 = arith.mulf %84, %83 : vector<1x128xf32>
    %86 = vector.broadcast %29 : f32 to vector<1x128xf32>
    %87 = arith.addf %85, %86 : vector<1x128xf32>
    %c0_19 = arith.constant 0 : index
    %c0_20 = arith.constant 0 : index
    %c0_21 = arith.constant 0 : index
    %88 = vector.load %arg5[%c0_19, %c0_20, %c0_21] : memref<1x2x128xf32, #tpu.memory_space<vmem>>, vector<1x1x128xf32>
    %89 = vector.shape_cast %88 : vector<1x1x128xf32> to vector<1x128xf32>
    %90 = vector.shape_cast %87 : vector<1x128xf32> to vector<1x1x128xf32>
    tpu.vector_store %arg5[%c0_19, %c0_20, %c0_21], %90 {strides = array<i32>} : memref<1x2x128xf32, #tpu.memory_space<vmem>>, vector<1x1x128xf32>,
    %91 = arith.mulf %57, %82 : vector<1x128xf32>
    %92 = vector.broadcast %27 : f32 to vector<1x128xf32>
    %93 = arith.mulf %92, %91 : vector<1x128xf32>
    %94 = vector.broadcast %31 : f32 to vector<1x128xf32>
    %95 = arith.addf %93, %94 : vector<1x128xf32>
    %c0_22 = arith.constant 0 : index
    %c1_23 = arith.constant 1 : index
    %c0_24 = arith.constant 0 : index
    %96 = vector.load %arg5[%c0_22, %c1_23, %c0_24] : memref<1x2x128xf32, #tpu.memory_space<vmem>>, vector<1x1x128xf32>
    %97 = vector.shape_cast %96 : vector<1x1x128xf32> to vector<1x128xf32>
    %98 = vector.shape_cast %95 : vector<1x128xf32> to vector<1x1x128xf32>
    tpu.vector_store %arg5[%c0_22, %c1_23, %c0_24], %98 {strides = array<i32>} : memref<1x2x128xf32, #tpu.memory_space<vmem>>, vector<1x1x128xf32>,
    return
  }
  func.func @transform_0(%arg0: i32, %arg1: i32) -> (i32, i32) {
    %c0_i32 = arith.constant 0 : i32
    %c0_i32_0 = arith.constant 0 : i32
    %c0_i32_1 = arith.constant 0 : i32
    return %c0_i32, %c0_i32_0 : i32, i32
  }
  func.func @transform_1(%arg0: i32, %arg1: i32) -> (i32, i32, i32) {
    %c0_i32 = arith.constant 0 : i32
    %c0_i32_0 = arith.constant 0 : i32
    return %arg0, %c0_i32, %arg1 : i32, i32, i32
  }
  func.func @transform_2(%arg0: i32, %arg1: i32) -> (i32, i32, i32) {
    %c0_i32 = arith.constant 0 : i32
    %c0_i32_0 = arith.constant 0 : i32
    return %arg0, %c0_i32, %arg1 : i32, i32, i32
  }
  func.func @transform_3(%arg0: i32, %arg1: i32) -> (i32, i32, i32) {
    %c0_i32 = arith.constant 0 : i32
    %c0_i32_0 = arith.constant 0 : i32
    return %arg0, %c0_i32, %arg1 : i32, i32, i32
  }
}

</mosaic_0001>

<llo_original>
// kernel: tpu_custom_call.1
$region0: #{tpu_custom_call.1}
  #allocation0 [shape = 'u32[]', space=smem, size = 0x4, offset = 0x4, fixed_abs, tag = 'smem constant byte address 0x4 - core index']
  #allocation1 [shape = 'u32[144,128]{1,0:T(1,128)}', space=vmem, size = 0x12000, scoped, tag = 'internal scratch']
  %s0 = inlined_call_operand.vmem [shape: f32[2,16], index: 0, kind: input, shape index: {}]
  %s1 = inlined_call_operand.vmem [shape: f32[2,3,128], index: 1, kind: input, shape index: {}]
  %s2 = inlined_call_operand.vmem [shape: f32[2,3,128], index: 2, kind: output, shape index: {0}]
  %s3 = inlined_call_operand.hbm [shape: f32[2,2,128], index: 3, kind: output, shape index: {1}]
  %4 = xla_tuple %s2, %s3
  %s5 = sld [smem:[#allocation0]]
  $region53: #{tpu_custom_call.1} parent=0
    _
  %s7 = ssub.s32 1, %s5
  %s8 = scalar_select 0, %s7, %s5
  $region1: #{tpu_custom_call.1} parent=0
    #allocation2 [shape = 'u8[1024]{0}', space=smem, size = 0x400, scoped, tag = 'input window, operand 0, single buffered']
    #allocation3 [shape = 's32[2]{0}', space=sflag, size = 0x8, scoped, tag = 'scoped memory for tpu_custom_call.1']
    #allocation4 [shape = 's32[2]{0}', space=sflag, size = 0x8, scoped, tag = 'scoped memory for tpu_custom_call.1']
    #allocation5 [shape = 'u8[2048]{0}', space=vmem, size = 0x800, scoped, tag = 'output window, operand 1']
    %9 = vsyncpa [#allocation4], 0
    %10 = vsyncpa [#allocation3], 0
    %s11 = scalar_lea.sflag [#allocation3], 1
    %12 = vsyncpa %s11, 0
    loop: start=0, step=1, limit=4
    $region2: #{tpu_custom_call.1} parent=1 // loop_pre_header
      _
    $region3: #{tpu_custom_call.1} parent=1 // loop_header
      %s14 = sphi 0, %s18
      %p15 = scmp.ge.s32.totalorder %s14, 4
      %s21 = sphi 0, %s33
      %s22 = sphi 0, %s29
      %s23 = sphi 0, %s21
      %s24 = sphi 0, %s22
      %s25 = sphi 0, %s23
      %s26 = sphi 0, %s24
      %s34 = sphi 0, %s34
      %s36 = sphi 0, %s34
      %s37 = sphi 0, %s36
      %s51 = sphi 0, %s37
      %s59 = sphi 0, %s61
      %s62 = sphi 0, %s59
      %s63 = sphi 0, %s62
      %s79 = sphi 0, %s63
      %s87 = sphi 0, %s89
      %s90 = sphi 0, %s87
      %s91 = sphi 0, %s90
      %s107 = sphi 0, %s91
      %s115 = sphi 0, %s117
      %s118 = sphi 0, %s115
      %s119 = sphi 0, %s118
      %s135 = sphi 0, %s119
    $region4: #{tpu_custom_call.1} parent=1 // loop_header_branch
      %17 = sbr.rel (%p15) target = $region8
    $region5: #{tpu_custom_call.1} parent=1 // loop_body
      %s19 = ssub.s32 %s14, 1
      %s20 = ssub.s32 %s14, 2
      %s27 = sadd.s32 1, %s22
      %p28 = scmp.ge.s32.totalorder %s27, 1
      %s29 = scalar_select %p28, 0, %s27
      %s30 = sadd.s32 1, %s21
      %s31 = scalar_select %p28, %s30, %s21
      %p32 = scmp.ge.s32.totalorder %s31, 2
      %s33 = scalar_select %p32, 0, %s31
      %s35 = sadd.s32 %s34, 1
      %p38 = scmp.eq.s32.totalorder %s14, 1
      %p39 = scmp.ne.s32.totalorder %s34, %s36
      %p40 = scmp.eq.s32.totalorder %s14, 0
      %p41 = por %p39, %p40
      %p42 = scmp.ne.s32.totalorder %s34, %s36
      %p43 = scmp.eq.s32.totalorder %s19, 1
      %p44 = por %p42, %p43
      %p45 = scmp.ne.s32.totalorder %s36, %s37
      %p46 = scmp.eq.s32.totalorder %s19, 0
      %p47 = por %p45, %p46
      %p48 = scmp.ne.s32.totalorder %s36, %s37
      %p49 = scmp.eq.s32.totalorder %s20, 1
      %p50 = por %p48, %p49
      %p52 = scmp.ne.s32.totalorder %s37, %s51
      %p53 = scmp.eq.s32.totalorder %s20, 0
      %p54 = por %p52, %p53
      %s55 = ssub.s32 %s21, %s33
      %s56 = ssub.s32 %s22, %s29
      %s57 = sor.u32 %s55, %s56
      %p58 = scmp.eq.s32.totalorder %s57, 0
      %s60 = sadd.s32 %s59, 1
      %s61 = scalar_select %p58, %s59, %s60
      %p64 = pneg %p58
      %p65 = scmp.eq.s32.totalorder %s14, 1
      %p66 = por %p64, %p65
      %p67 = scmp.ne.s32.totalorder %s59, %s62
      %p68 = scmp.eq.s32.totalorder %s14, 0
      %p69 = por %p67, %p68
      %p70 = scmp.ne.s32.totalorder %s59, %s62
      %p71 = scmp.eq.s32.totalorder %s19, 1
      %p72 = por %p70, %p71
      %p73 = scmp.ne.s32.totalorder %s62, %s63
      %p74 = scmp.eq.s32.totalorder %s19, 0
      %p75 = por %p73, %p74
      %p76 = scmp.ne.s32.totalorder %s62, %s63
      %p77 = scmp.eq.s32.totalorder %s20, 1
      %p78 = por %p76, %p77
      %p80 = scmp.ne.s32.totalorder %s63, %s79
      %p81 = scmp.eq.s32.totalorder %s20, 0
      %p82 = por %p80, %p81
      %s83 = ssub.s32 %s21, %s33
      %s84 = ssub.s32 %s22, %s29
      %s85 = sor.u32 %s83, %s84
      %p86 = scmp.eq.s32.totalorder %s85, 0
      %s88 = sadd.s32 %s87, 1
      %s89 = scalar_select %p86, %s87, %s88
      %p92 = pneg %p86
      %p93 = scmp.eq.s32.totalorder %s14, 1
      %p94 = por %p92, %p93
      %p95 = scmp.ne.s32.totalorder %s87, %s90
      %p96 = scmp.eq.s32.totalorder %s14, 0
      %p97 = por %p95, %p96
      %p98 = scmp.ne.s32.totalorder %s87, %s90
      %p99 = scmp.eq.s32.totalorder %s19, 1
      %p100 = por %p98, %p99
      %p101 = scmp.ne.s32.totalorder %s90, %s91
      %p102 = scmp.eq.s32.totalorder %s19, 0
      %p103 = por %p101, %p102
      %p104 = scmp.ne.s32.totalorder %s90, %s91
      %p105 = scmp.eq.s32.totalorder %s20, 1
      %p106 = por %p104, %p105
      %p108 = scmp.ne.s32.totalorder %s91, %s107
      %p109 = scmp.eq.s32.totalorder %s20, 0
      %p110 = por %p108, %p109
      %s111 = ssub.s32 %s21, %s33
      %s112 = ssub.s32 %s22, %s29
      %s113 = sor.u32 %s111, %s112
      %p114 = scmp.eq.s32.totalorder %s113, 0
      %s116 = sadd.s32 %s115, 1
      %s117 = scalar_select %p114, %s115, %s116
      %p120 = pneg %p114
      %p121 = scmp.eq.s32.totalorder %s14, 1
      %p122 = por %p120, %p121
      %p123 = scmp.ne.s32.totalorder %s115, %s118
      %p124 = scmp.eq.s32.totalorder %s14, 0
      %p125 = por %p123, %p124
      %p126 = scmp.ne.s32.totalorder %s115, %s118
      %p127 = scmp.eq.s32.totalorder %s19, 1
      %p128 = por %p126, %p127
      %p129 = scmp.ne.s32.totalorder %s118, %s119
      %p130 = scmp.eq.s32.totalorder %s19, 0
      %p131 = por %p129, %p130
      %p132 = scmp.ne.s32.totalorder %s118, %s119
      %p133 = scmp.eq.s32.totalorder %s20, 1
      %p134 = por %p132, %p133
      %p136 = scmp.ne.s32.totalorder %s119, %s135
      %p137 = scmp.eq.s32.totalorder %s20, 0
      %p138 = por %p136, %p137
      %p139 = scmp.le.s32.totalorder 1, %s14
      %p140 = scmp.lt.s32.totalorder %s14, 3
      %p141 = pnand %p139, %p140
      %p142 = pneg %p141
      // Predicated region
      $region9: #{tpu_custom_call.1} parent=5 // pred_check
        _
      $region10: #{tpu_custom_call.1} parent=5 // pred_check_branch
        %144 = sbr.rel (%p141) target = $region12
      $region11: #{tpu_custom_call.1} parent=5 // pred_region
        %s145 = ssub.s32 %s14, 1
        // Predicated region
        $region13: #{tpu_custom_call.1} parent=11 // pred_check
          %p146 = pneg %p47
        $region14: #{tpu_custom_call.1} parent=11 // pred_check_branch
          %148 = sbr.rel (%p146) target = $region16
        $region15: #{tpu_custom_call.1} parent=11 // pred_region
          %s150 = ssub.s32 32, 32
          %151 = vsyncadd [#allocation4], %s150
          %s153 = sshll.u32 %s0, 4
          %s154 = int_to_ptr.vmem [resolvable:$true] %s153
          %156 = dma.vmem_to_smem %s154, 32, [#allocation2], [#allocation4]
        $region16: #{tpu_custom_call.1} parent=11 // pred_fallthru
          _
      $region12: #{tpu_custom_call.1} parent=5 // pred_fallthru
        _
      %p157 = scmp.lt.s32.totalorder %s14, 2
      // Predicated region
      $region17: #{tpu_custom_call.1} parent=5 // pred_check
        %p158 = pneg %p157
      $region18: #{tpu_custom_call.1} parent=5 // pred_check_branch
        %160 = sbr.rel (%p158) target = $region20
      $region19: #{tpu_custom_call.1} parent=5 // pred_region
        // Predicated region
        $region21: #{tpu_custom_call.1} parent=19 // pred_check
          %p161 = pneg %p69
        $region22: #{tpu_custom_call.1} parent=19 // pred_check_branch
          %163 = sbr.rel (%p161) target = $region24
        $region23: #{tpu_custom_call.1} parent=19 // pred_region
          %p164 = scmp.lt.s32.totalorder %s21, 1
          %s165 = scalar_select %p164, %s21, 1
          %p166 = scmp.lt.s32.totalorder %s22, 0
          %s167 = scalar_select %p166, %s22, 0
          %s168 = sadd.s32 %s167, %s165
          %s169 = smul.addr %s168, 4
          %s170 = scalar_lea.vmem %s1, %s169
        $region24: #{tpu_custom_call.1} parent=19 // pred_fallthru
          _
      $region20: #{tpu_custom_call.1} parent=5 // pred_fallthru
        _
      %p171 = scmp.le.s32.totalorder 1, %s14
      %p172 = scmp.lt.s32.totalorder %s14, 3
      %p173 = pnand %p171, %p172
      %p174 = pneg %p173
      // Predicated region
      $region25: #{tpu_custom_call.1} parent=5 // pred_check
        _
      $region26: #{tpu_custom_call.1} parent=5 // pred_check_branch
        %176 = sbr.rel (%p173) target = $region28
      $region27: #{tpu_custom_call.1} parent=5 // pred_region
        %s177 = ssub.s32 %s14, 1
        // Predicated region
        $region29: #{tpu_custom_call.1} parent=27 // pred_check
          %p178 = pneg %p47
        $region30: #{tpu_custom_call.1} parent=27 // pred_check_branch
          %180 = sbr.rel (%p178) target = $region32
        $region31: #{tpu_custom_call.1} parent=27 // pred_region
          %181 = dma.done [#allocation4], 32
        $region32: #{tpu_custom_call.1} parent=27 // pred_fallthru
          _
        %182 = sfence
        %p183 = pneg %p47
        %p184 = pneg %p44
        %p185 = scmp.lt.s32.totalorder %s23, 1
        %s186 = scalar_select %p185, %s23, 1
        %p187 = scmp.lt.s32.totalorder %s24, 0
        %s188 = scalar_select %p187, %s24, 0
        %s189 = sadd.s32 %s188, %s186
        %s190 = smul.addr %s189, 4
        %s191 = scalar_lea.vmem %s1, %s190
        %p192 = pneg %p75
        %p193 = pneg %p72
        %p194 = pneg %p103
        %p195 = pneg %p100
        %p196 = scmp.lt.s32.totalorder %s23, 1
        %s197 = scalar_select %p196, %s23, 1
        %p198 = scmp.lt.s32.totalorder %s24, 0
        %s199 = scalar_select %p198, %s24, 0
        %s200 = sadd.s32 %s199, %s197
        %s201 = smul.addr %s200, 4
        %s202 = scalar_lea.vmem %s2, %s201
        %p203 = pneg %p131
        %p204 = pneg %p128
        %s205 = sand.u32 %s118, 1
        %s206 = scalar_lea.sflag [#allocation3], %s205
        %s207 = sand.u32 %s118, 1
        %s208 = smul.addr %s207, 2
        %s209 = scalar_lea.vmem [#allocation5], %s208
        %p210 = scmp.lt.s32.totalorder %s23, 1
        %s211 = scalar_select %p210, %s23, 1
        %p212 = scmp.lt.s32.totalorder %s24, 0
        %s213 = scalar_select %p212, %s24, 0
        %s214 = sadd.s32 %s213, %s211
        %s215 = smul.addr %s214, 4
        %s216 = scalar_lea.vmem %s1, %s215
        %p217 = scmp.lt.s32.totalorder %s23, 1
        %s218 = scalar_select %p217, %s23, 1
        %p219 = scmp.lt.s32.totalorder %s24, 0
        %s220 = scalar_select %p219, %s24, 0
        %s221 = sadd.s32 %s220, %s218
        %s222 = smul.addr %s221, 4
        %s223 = scalar_lea.vmem %s2, %s222
        %s224 = smul.u32 %s23, 128
        %s225 = sld [smem:[#allocation2 + %s224]]
        %s226 = sadd.s32 %s224, 1
        %s227 = sld [smem:[#allocation2 + %s226]]
        %s228 = sadd.s32 %s224, 2
        %s229 = sld [smem:[#allocation2 + %s228]]
        %s230 = sadd.s32 %s224, 3
        %s231 = sld [smem:[#allocation2 + %s230]]
        %s232 = sadd.s32 %s224, 4
        %s233 = sld [smem:[#allocation2 + %s232]]
        %s234 = sadd.s32 %s224, 5
        %s235 = sld [smem:[#allocation2 + %s234]]
        %s236 = sadd.s32 %s224, 6
        %s237 = sld [smem:[#allocation2 + %s236]]
        %s238 = sadd.s32 %s224, 7
        %s239 = sld [smem:[#allocation2 + %s238]]
        %s240 = sadd.s32 %s224, 8
        %s241 = sld [smem:[#allocation2 + %s240]]
        %s242 = sadd.s32 %s224, 9
        %s243 = sld [smem:[#allocation2 + %s242]]
        %s244 = sadd.s32 %s224, 10
        %s245 = sld [smem:[#allocation2 + %s244]]
        %s246 = sadd.s32 %s224, 11
        %s247 = sld [smem:[#allocation2 + %s246]]
        %s248 = sadd.s32 %s224, 12
        %s249 = sld [smem:[#allocation2 + %s248]]
        %s250 = sadd.s32 %s224, 13
        %s251 = sld [smem:[#allocation2 + %s250]]
        %s252 = sadd.s32 %s224, 14
        %s253 = sld [smem:[#allocation2 + %s252]]
        %s254 = sadd.s32 %s224, 15
        %s255 = sld [smem:[#allocation2 + %s254]]
        %v256 = vld [vmem:[%s216] sm:$0x1]
        %v257 = vld [vmem:[%s216 + $0x1] sm:$0x1]
        %v258 = vld [vmem:[%s216 + $0x2] sm:$0x1]
        %v259 = vstv %s225
        %v260 = vmul.f32 %v259, %v256
        %v261 = vstv %s227
        %v262 = vmul.f32 %v261, %v257
        %v263 = vadd.f32 %v260, %v262
        %v264 = vstv %s229
        %v265 = vmul.f32 %v264, %v258
        %v266 = vadd.f32 %v263, %v265
        %v267 = vstv %s243
        %v268 = vadd.f32 %v266, %v267
        %v269 = vstv %s231
        %v270 = vmul.f32 %v269, %v256
        %v271 = vstv %s233
        %v272 = vmul.f32 %v271, %v257
        %v273 = vadd.f32 %v270, %v272
        %v274 = vstv %s235
        %v275 = vmul.f32 %v274, %v258
        %v276 = vadd.f32 %v273, %v275
        %v277 = vstv %s245
        %v278 = vadd.f32 %v276, %v277
        %v279 = vstv %s237
        %v280 = vmul.f32 %v279, %v256
        %v281 = vstv %s239
        %v282 = vmul.f32 %v281, %v257
        %v283 = vadd.f32 %v280, %v282
        %v284 = vstv %s241
        %v285 = vmul.f32 %v284, %v258
        %v286 = vadd.f32 %v283, %v285
        %v287 = vstv %s247
        %v288 = vadd.f32 %v286, %v287
        %289 = vst [vmem:[%s223] sm:$0x1] %v268
        %290 = vst [vmem:[%s223 + $0x1] sm:$0x1] %v278
        %291 = vst [vmem:[%s223 + $0x2] sm:$0x1] %v288
        %v292 = vrcp.pop %v288
        %v293 = vand.u32 2147483647, %v288
        %vm294 = vcmp.gt.f32.partialorder %v293, 1e-08
        %v295 = vsel %vm294, %v292, 1.0
        %v296 = vmul.f32 %v268, %v295
        %v297 = vstv %s249
        %v298 = vmul.f32 %v297, %v296
        %v299 = vstv %s253
        %v300 = vadd.f32 %v298, %v299
        %301 = vst [vmem:[%s209] sm:$0x1] %v300
        %v302 = vmul.f32 %v278, %v295
        %v303 = vstv %s251
        %v304 = vmul.f32 %v303, %v302
        %v305 = vstv %s255
        %v306 = vadd.f32 %v304, %v305
        %307 = vst [vmem:[%s209 + $0x1] sm:$0x1] %v306
        %p308 = scmp.lt.s32.totalorder %s23, 1
        %s309 = scalar_select %p308, %s23, 1
        %p310 = scmp.lt.s32.totalorder %s24, 0
        %s311 = scalar_select %p310, %s24, 0
        %s312 = sadd.s32 %s311, %s309
        %s313 = smul.addr %s312, 4
        %s314 = scalar_lea.vmem %s2, %s313
        %s315 = sand.u32 %s118, 1
        %s316 = scalar_lea.sflag [#allocation3], %s315
        %s317 = sand.u32 %s118, 1
        %s318 = smul.addr %s317, 2
        %s319 = scalar_lea.vmem [#allocation5], %s318
        // Predicated region
        $region33: #{tpu_custom_call.1} parent=27 // pred_check
          %p320 = pneg %p100
        $region34: #{tpu_custom_call.1} parent=27 // pred_check_branch
          %322 = sbr.rel (%p320) target = $region36
        $region35: #{tpu_custom_call.1} parent=27 // pred_region
          _
        $region36: #{tpu_custom_call.1} parent=27 // pred_fallthru
          _
        // Predicated region
        $region37: #{tpu_custom_call.1} parent=27 // pred_check
          %p323 = pneg %p128
        $region38: #{tpu_custom_call.1} parent=27 // pred_check_branch
          %325 = sbr.rel (%p323) target = $region40
        $region39: #{tpu_custom_call.1} parent=27 // pred_region
          %s327 = ssub.s32 32, 32
          %328 = vsyncadd %s316, %s327
          %s329 = sadd.s32 %s24, %s23
          %s330 = smul.addr %s329, 32
          %s331 = scalar_lea.hbm %s3, %s330
          %s333 = sshll.u32 %s319, 4
          %s334 = int_to_ptr.vmem [resolvable:$true] %s333
          %336 = dma.vmem_to_hbm [thread:$0]  %s334, 32, %s331, %s316
        $region40: #{tpu_custom_call.1} parent=27 // pred_fallthru
          _
      $region28: #{tpu_custom_call.1} parent=5 // pred_fallthru
        _
      %p337 = scmp.le.s32.totalorder 2, %s14
      // Predicated region
      $region41: #{tpu_custom_call.1} parent=5 // pred_check
        %p338 = pneg %p337
      $region42: #{tpu_custom_call.1} parent=5 // pred_check_branch
        %340 = sbr.rel (%p338) target = $region44
      $region43: #{tpu_custom_call.1} parent=5 // pred_region
        %s341 = ssub.s32 %s14, 2
        // Predicated region
        $region45: #{tpu_custom_call.1} parent=43 // pred_check
          %p342 = pneg %p106
        $region46: #{tpu_custom_call.1} parent=43 // pred_check_branch
          %344 = sbr.rel (%p342) target = $region48
        $region47: #{tpu_custom_call.1} parent=43 // pred_region
          %p345 = scmp.lt.s32.totalorder %s25, 1
          %s346 = scalar_select %p345, %s25, 1
          %p347 = scmp.lt.s32.totalorder %s26, 0
          %s348 = scalar_select %p347, %s26, 0
          %s349 = sadd.s32 %s348, %s346
          %s350 = smul.addr %s349, 4
          %s351 = scalar_lea.vmem %s2, %s350
        $region48: #{tpu_custom_call.1} parent=43 // pred_fallthru
          _
        // Predicated region
        $region49: #{tpu_custom_call.1} parent=43 // pred_check
          %p352 = pneg %p134
        $region50: #{tpu_custom_call.1} parent=43 // pred_check_branch
          %354 = sbr.rel (%p352) target = $region52
        $region51: #{tpu_custom_call.1} parent=43 // pred_region
          %s355 = sand.u32 %s119, 1
          %s356 = scalar_lea.sflag [#allocation3], %s355
          %s357 = sand.u32 %s119, 1
          %s358 = smul.addr %s357, 2
          %s359 = scalar_lea.vmem [#allocation5], %s358
          %360 = dma.done %s356, 32
        $region52: #{tpu_custom_call.1} parent=43 // pred_fallthru
          _
      $region44: #{tpu_custom_call.1} parent=5 // pred_fallthru
        _
    $region6: #{tpu_custom_call.1} parent=1 // loop_footer
      %s18 = sadd.s32 1, %s14
    $region7: #{tpu_custom_call.1} parent=1 // loop_footer_branch
      %13 = sbr.rel target = $region3
    $region8: #{tpu_custom_call.1} parent=1 // loop_exit
      _
    %361 = vsyncpa [#allocation3], 1
    %s362 = scalar_lea.sflag [#allocation3], 1
    %363 = vsyncpa %s362, 1
    %364 = vsyncpa [#allocation4], 1
    %s365 = scalar_lea.sflag [#allocation4], 1
    %366 = vsyncpa %s365, 1

</llo_original>
